<compile_context>
chip_gen: v7x
topology: tpu7x:2x2x1
jax: 0.10.0
libtpu: 0.0.40
codegen_flags: <defaults>
</compile_context>

<pallas_src>
import functools

import jax
import jax.numpy as jnp
from jax import lax
from jax.experimental import pallas as pl
from jax.experimental.pallas import tpu as pltpu


def _round_up(x: int, m: int) -> int:
    return ((x + m - 1) // m) * m


def _cdiv(a: int, b: int) -> int:
    return -(-a // b)


def _largest_dividing_tile(dim: int, align: int, cap: int) -> int:
    """Largest multiple of `align` <= cap that divides `dim` exactly.

    Assumes dim % align == 0, so `align` itself is always a valid fallback.
    """
    t = (cap // align) * align
    while t >= align:
        if dim % t == 0:
            return t
        t -= align
    return align


# ----------------------------------------------------------------------------
# Kernel bodies
# ----------------------------------------------------------------------------

def _fc_kernel_single_k(x_ref, w_ref, b_ref, o_ref, *, use_lrelu: bool,
                        slope: float):
    # One K step: y = x @ W^T + b computed in a single dot, no accumulator.
    # Weight is in native [N, K] layout; contraction over the last dim of both.
    y = lax.dot_general(
        x_ref[...], w_ref[...],
        dimension_numbers=(((1,), (1,)), ((), ())),
        preferred_element_type=jnp.float32)
    y = y + b_ref[...].astype(jnp.float32)
    if use_lrelu:
        y = jnp.where(y >= 0, y, slope * y)
    o_ref[...] = y.astype(o_ref.dtype)


def _fc_kernel_multi_k(x_ref, w_ref, b_ref, o_ref, acc_ref, *, use_lrelu: bool,
                       slope: float):
    # Requires: k innermost, "arbitrary", output block index constant over k.
    k = pl.program_id(2)
    nk = pl.num_programs(2)

    partial = lax.dot_general(
        x_ref[...], w_ref[...],
        dimension_numbers=(((1,), (1,)), ((), ())),
        preferred_element_type=jnp.float32)

    @pl.when(k == 0)
    def _():
        # Bias rides on the (already required) accumulator init write.
        acc_ref[...] = jnp.broadcast_to(
            b_ref[...].astype(jnp.float32), acc_ref.shape)

    @pl.when(k < nk - 1)
    def _():
        acc_ref[...] += partial

    @pl.when(k == nk - 1)
    def _():
        # Merged last-k accumulate + epilogue: one read of acc, one store of o,
        # no redundant acc store/reload.
        y = acc_ref[...] + partial
        if use_lrelu:
            y = jnp.where(y >= 0, y, slope * y)
        o_ref[...] = y.astype(o_ref.dtype)


# ----------------------------------------------------------------------------
# Wrapper
# ----------------------------------------------------------------------------

def _chip_budgets():
    vmem_bytes = 128 << 20
    try:
        info = pltpu.get_tpu_info()
        vmem_bytes = int(getattr(info, "vmem_capacity_bytes", vmem_bytes))
    except Exception:
        pass
    if vmem_bytes <= (64 << 20):
        # v7x-class: 64 MiB VMEM per TensorCore, 2 TCs per chip.
        return dict(stream=14 << 20, vmem_cap=48 << 20, tm_cap=256,
                    two_core=True)
    # v5e / v6e: 128 MiB VMEM, 1 TC.
    return dict(stream=48 << 20, vmem_cap=100 << 20, tm_cap=512,
                two_core=False)


def fc_forward(x, weight, bias, *, act="None", flatten="flatten",
               _stream_budget_bytes=None):
    """Pallas implementation of FC.forward.

    x:      input; if flatten == 'flatten' it is reshaped to [B, -1].
    weight: PyTorch-convention Linear weight, shape [out_ch, in_ch] (kept as-is).
    bias:   shape [out_ch].
    """
    if flatten == "flatten":
        x2 = x.reshape(x.shape[0], -1)
    else:
        x2 = x  # nn.Identity(): caller supplies [B, in_ch]

    B, K = x2.shape
    N, K_w = weight.shape
    assert K == K_w, f"in_ch mismatch: {K} vs {K_w}"

    if weight.dtype != x2.dtype:
        # TODO(synk): hoist this cast to model-init time in a real deployment.
        weight = weight.astype(x2.dtype)

    out_dtype = x2.dtype
    itemsize = jnp.dtype(x2.dtype).itemsize
    # Native sublane packing: f32 -> 8, bf16 -> 16, int8/fp8 -> 32.
    sub_align = 8 * max(1, 4 // itemsize)

    cfg = _chip_budgets()
    stream_budget = _stream_budget_bytes or cfg["stream"]
    tm_cap = cfg["tm_cap"]

    # ---- N (out_features): never pad the weight for small / odd N -----------
    if N % 128 == 0 and N > 256:
        tn = _largest_dividing_tile(N, 128, 256)     # tiles N without padding
        Np = N
    elif N <= 4096:
        tn = N                                       # full-dim block (legal for
        Np = N                                       # any N; masked store if <128)
    else:
        tn = 256                                     # rare fallback: pad weight
        Np = _round_up(N, tn)

    # ---- B (batch): balanced tiling, no padding when B fits one block -------
    if B <= tm_cap:
        tm = B
        Bp = B
    else:
        nb = _cdiv(B, tm_cap)
        tm = _round_up(_cdiv(B, nb), sub_align)      # waste < 1 tile
        Bp = _round_up(B, tm)

    # ---- K (reduction): prefer a single K step ------------------------------
    tk_budget = stream_budget // (2 * (tm + tn) * itemsize)
    if K <= max(tk_budget, 128):
        tk = K                                       # one K step, no padding
        Kp = K
    else:
        Kp = _round_up(K, 128)
        tk_cap = max(128, (tk_budget // 128) * 128)
        tk = _largest_dividing_tile(Kp, 128, min(tk_cap, Kp))

    # ---- v7x: make sure the second TensorCore gets work ---------------------
    if cfg["two_core"] and (Bp // tm) * (Np // tn) == 1:
        if B >= 2 * sub_align:
            tm = max(sub_align, ((B // 2) // sub_align) * sub_align)
            Bp = _round_up(B, tm)
        elif N >= 256 and N % 256 == 0:
            tn = N // 2

    # ---- operand padding (only where unavoidable; zero pad is inert) --------
    if (Bp, Kp) != (B, K):
        x2 = jnp.pad(x2, ((0, Bp - B), (0, Kp - K)))
    if (Np, Kp) != (N, K):
        weight = jnp.pad(weight, ((0, Np - N), (0, Kp - K)))
    b2 = bias.reshape(1, N)
    if b2.dtype != x2.dtype:
        b2 = b2.astype(x2.dtype)
    if Np != N:
        b2 = jnp.pad(b2, ((0, 0), (0, Np - N)))

    grid = (Bp // tm, Np // tn, Kp // tk)
    multi_k = grid[2] > 1

    # ---- VMEM budget (est already counts double-buffering; 1.35x headroom) --
    out_itemsize = jnp.dtype(out_dtype).itemsize
    est = (2 * (tm * tk + tn * tk) * itemsize        # double-buffered x & W tiles
           + 2 * tm * tn * out_itemsize              # double-buffered output tile
           + (tm * tn * 4 if multi_k else 0)         # f32 accumulator scratch
           + 2 * tn * itemsize)                      # bias tile
    vmem_limit = int(min(cfg["vmem_cap"], max(int(est * 1.35), 32 << 20)))

    if multi_k:
        kernel = functools.partial(_fc_kernel_multi_k,
                                   use_lrelu=(act == "lrelu"), slope=0.2)
        scratch_shapes = [pltpu.VMEM((tm, tn), jnp.float32)]
    else:
        kernel = functools.partial(_fc_kernel_single_k,
                                   use_lrelu=(act == "lrelu"), slope=0.2)
        scratch_shapes = []

    dim_sems = ("parallel", "parallel", "arbitrary")
    assert dim_sems[-1] == "arbitrary"   # k must stay innermost & non-parallel

    out_padded = pl.pallas_call(
        kernel,
        out_shape=jax.ShapeDtypeStruct((Bp, Np), out_dtype),
        grid_spec=pltpu.PrefetchScalarGridSpec(
            num_scalar_prefetch=0,
            grid=grid,
            in_specs=[
                pl.BlockSpec((tm, tk), lambda i, j, k: (i, k)),   # x tile
                pl.BlockSpec((tn, tk), lambda i, j, k: (j, k)),   # W tile [N,K]
                pl.BlockSpec((1, tn), lambda i, j, k: (0, j)),    # bias tile
            ],
            out_specs=pl.BlockSpec((tm, tn), lambda i, j, k: (i, j)),
            scratch_shapes=scratch_shapes,
        ),
        compiler_params=pltpu.CompilerParams(
            dimension_semantics=dim_sems,
            vmem_limit_bytes=vmem_limit,
        ),
    )(x2, weight, b2)

    if (Bp, Np) != (B, N):
        out_padded = out_padded[:B, :N]
    return out_padded


# ----------------------------------------------------------------------------
# Self-test
# ----------------------------------------------------------------------------

if __name__ == "__main__":
    # FC(in_ch=C*H*W, out_ch=32, act='lrelu', flatten='flatten')
    B, C, H, W = 2, 4, 16, 16
    in_ch = C * H * W      # 1024
    out_ch = 32

    key = jax.random.PRNGKey(0)
    kx, kw, kb = jax.random.split(key, 3)

    x = jax.random.normal(kx, (B, C, H, W), dtype=jnp.float32)

    # Deterministic PyTorch-style init: U(-1/sqrt(in_ch), 1/sqrt(in_ch))
    bound = 1.0 / (in_ch ** 0.5)
    weight = jax.random.uniform(kw, (out_ch, in_ch), jnp.float32, -bound, bound)
    bias = jax.random.uniform(kb, (out_ch,), jnp.float32, -bound, bound)

    out = fc_forward(x, weight, bias, act="lrelu", flatten="flatten")
    out = jax.block_until_ready(out)

    ref = x.reshape(B, -1) @ weight.T + bias
    ref = jnp.where(ref >= 0, ref, 0.2 * ref)
    assert out.shape == (B, out_ch)
    assert jnp.allclose(out, ref, atol=1e-5, rtol=1e-5)

    # Non-aligned shapes (in_ch % 128 != 0, out_ch % 128 != 0): single-K path,
    # full-dim blocks, no padding of any operand.
    B2, in2, out2 = 5, 300, 50
    k2x, k2w, k2b = jax.random.split(jax.random.PRNGKey(1), 3)
    x_b = jax.random.normal(k2x, (B2, in2), dtype=jnp.float32)
    w_b = jax.random.normal(k2w, (out2, in2), dtype=jnp.float32) * 0.05
    b_b = jax.random.normal(k2b, (out2,), dtype=jnp.float32) * 0.05
    out_b = jax.block_until_ready(
        fc_forward(x_b, w_b, b_b, act="None", flatten="none"))
    ref_b = x_b @ w_b.T + b_b
    assert out_b.shape == (B2, out2)
    assert jnp.allclose(out_b, ref_b, atol=1e-4, rtol=1e-4)

    # Force the multi-K (accumulator + merged last-k epilogue) path by using a
    # tiny streaming budget, with K not a multiple of 128 (padding fallback).
    B3, in3, out3 = 9, 1000, 300
    k3x, k3w, k3b = jax.random.split(jax.random.PRNGKey(2), 3)
    x_c = jax.random.normal(k3x, (B3, in3), dtype=jnp.float32)
    w_c = jax.random.normal(k3w, (out3, in3), dtype=jnp.float32) * 0.05
    b_c = jax.random.normal(k3b, (out3,), dtype=jnp.float32) * 0.05
    out_c = jax.block_until_ready(
        fc_forward(x_c, w_c, b_c, act="lrelu", flatten="none",
                   _stream_budget_bytes=64 * 1024))
    ref_c = x_c @ w_c.T + b_c
    ref_c = jnp.where(ref_c >= 0, ref_c, 0.2 * ref_c)
    assert out_c.shape == (B3, out3)
    assert jnp.allclose(out_c, ref_c, atol=1e-4, rtol=1e-4)

    print("KERNEL_OK")
</pallas_src>

<mosaic_0001>
module attributes {stable_mosaic.version = 11 : i64} {
  func.func @_fc_kernel_single_k(%arg0: i32, %arg1: i32, %arg2: i32, %arg3: memref<2x1024xf32, #tpu.memory_space<vmem>>, %arg4: memref<32x1024xf32, #tpu.memory_space<vmem>>, %arg5: memref<1x32xf32, #tpu.memory_space<vmem>>, %arg6: memref<2x32xf32, #tpu.memory_space<vmem>>) attributes {dimension_semantics = [#tpu.dimension_semantics<parallel>, #tpu.dimension_semantics<parallel>, #tpu.dimension_semantics<arbitrary>], iteration_bounds = array<i64: 1, 1, 1>, scalar_prefetch = 0 : i64, scratch_operands = 0 : i64, tpu.core_type = #tpu.core_type<tc>, window_params = [{transform_indices = @transform_0, window_bounds = array<i64: 2, 1024>}, {transform_indices = @transform_1, window_bounds = array<i64: 32, 1024>}, {transform_indices = @transform_2, window_bounds = array<i64: 1, 32>}, {transform_indices = @transform_3, window_bounds = array<i64: 2, 32>}]} {
    %c0 = arith.constant 0 : index
    %c0_0 = arith.constant 0 : index
    %0 = vector.load %arg3[%c0, %c0_0] : memref<2x1024xf32, #tpu.memory_space<vmem>>, vector<2x1024xf32>
    %c0_1 = arith.constant 0 : index
    %c0_2 = arith.constant 0 : index
    %1 = vector.load %arg4[%c0_1, %c0_2] : memref<32x1024xf32, #tpu.memory_space<vmem>>, vector<32x1024xf32>
    %cst = arith.constant dense<0.000000e+00> : vector<2x32xf32>
    %2 = tpu.matmul %0, %1, %cst {dimension_numbers = #tpu.dot_dimension_numbers<[1], [1], [0], [0], [0, 0, 1, 0], [], []>} : vector<2x1024xf32>, vector<32x1024xf32>, vector<2x32xf32> -> vector<2x32xf32>
    %c0_3 = arith.constant 0 : index
    %c0_4 = arith.constant 0 : index
    %3 = vector.load %arg5[%c0_3, %c0_4] : memref<1x32xf32, #tpu.memory_space<vmem>>, vector<1x32xf32>
    %4 = vector.broadcast %3 : vector<1x32xf32> to vector<2x32xf32>
    %5 = arith.addf %2, %4 : vector<2x32xf32>
    %cst_5 = arith.constant 0.000000e+00 : f32
    %6 = vector.broadcast %cst_5 : f32 to vector<2x32xf32>
    %7 = arith.cmpf oge, %5, %6 : vector<2x32xf32>
    %cst_6 = arith.constant 2.000000e-01 : f32
    %8 = vector.broadcast %cst_6 : f32 to vector<2x32xf32>
    %9 = arith.mulf %8, %5 : vector<2x32xf32>
    %10 = arith.select %7, %5, %9 : vector<2x32xi1>, vector<2x32xf32>
    %c0_7 = arith.constant 0 : index
    %c0_8 = arith.constant 0 : index
    %11 = vector.load %arg6[%c0_7, %c0_8] : memref<2x32xf32, #tpu.memory_space<vmem>>, vector<2x32xf32>
    tpu.vector_store %arg6[%c0_7, %c0_8], %10 {strides = array<i32>} : memref<2x32xf32, #tpu.memory_space<vmem>>, vector<2x32xf32>,
    return
  }
  func.func @transform_0(%arg0: i32, %arg1: i32, %arg2: i32) -> (i32, i32) {
    %c0_i32 = arith.constant 0 : i32
    return %arg0, %arg2 : i32, i32
  }
  func.func @transform_1(%arg0: i32, %arg1: i32, %arg2: i32) -> (i32, i32) {
    %c0_i32 = arith.constant 0 : i32
    return %arg1, %arg2 : i32, i32
  }
  func.func @transform_2(%arg0: i32, %arg1: i32, %arg2: i32) -> (i32, i32) {
    %c0_i32 = arith.constant 0 : i32
    %c0_i32_0 = arith.constant 0 : i32
    return %c0_i32, %arg1 : i32, i32
  }
  func.func @transform_3(%arg0: i32, %arg1: i32, %arg2: i32) -> (i32, i32) {
    %c0_i32 = arith.constant 0 : i32
    return %arg0, %arg1 : i32, i32
  }
}

</mosaic_0001>

<llo_original>
// kernel: tpu_custom_call.1
$region0: #{tpu_custom_call.1}
  #allocation0 [shape = 'u32[]', space=smem, size = 0x4, offset = 0x4, fixed_abs, tag = 'smem constant byte address 0x4 - core index']
  #allocation1 [shape = 'u32[144,128]{1,0:T(1,128)}', space=vmem, size = 0x12000, scoped, tag = 'internal scratch']
  %s0 = inlined_call_operand.hbm [shape: f32[2,1024], index: 0, kind: input, shape index: {}]
  %s1 = inlined_call_operand.hbm [shape: f32[32,1024], index: 1, kind: input, shape index: {}]
  %s2 = inlined_call_operand.vmem [shape: f32[1,32], index: 2, kind: input, shape index: {}]
  %s3 = inlined_call_operand.hbm [shape: f32[2,32], index: 3, kind: output, shape index: {}]
  %s4 = sld [smem:[#allocation0]]
  $region30: #{tpu_custom_call.1} parent=0
    _
  %s6 = ssub.s32 1, %s4
  %s7 = scalar_select 0, %s6, %s4
  $region1: #{tpu_custom_call.1} parent=0
    #allocation2 [shape = 'u8[8192]{0}', space=vmem, size = 0x2000, scoped, tag = 'input window, operand 0, single buffered']
    #allocation3 [shape = 's32[1]{0}', space=sflag, size = 0x4, scoped, tag = 'scoped memory for tpu_custom_call.1']
    #allocation4 [shape = 's32[1]{0}', space=sflag, size = 0x4, scoped, tag = 'scoped memory for tpu_custom_call.1']
    #allocation5 [shape = 'u8[131072]{0}', space=vmem, size = 0x20000, scoped, tag = 'input window, operand 1, single buffered']
    #allocation6 [shape = 's32[1]{0}', space=sflag, size = 0x4, scoped, tag = 'scoped memory for tpu_custom_call.1']
    #allocation7 [shape = 'u8[1024]{0}', space=vmem, size = 0x400, scoped, tag = 'output window, operand 0, single buffered']
    %8 = vsyncpa [#allocation3], 0
    %9 = vsyncpa [#allocation6], 0
    %10 = vsyncpa [#allocation4], 0
    // Predicated region
    $region2: #{tpu_custom_call.1} parent=1 // pred_check
      _
    $region3: #{tpu_custom_call.1} parent=1 // pred_check_branch
      %12 = sbr.rel (0) target = $region5
    $region4: #{tpu_custom_call.1} parent=1 // pred_region
      %s14 = ssub.s32 256, 256
      %15 = vsyncadd [#allocation3], %s14
      %s17 = sshll.u32 [#allocation2], 4
      %s18 = int_to_ptr.vmem [resolvable:$true] %s17
      %20 = dma.hbm_to_vmem [thread:$0]  %s0, 256, %s18, [#allocation3]
    $region5: #{tpu_custom_call.1} parent=1 // pred_fallthru
      _
    // Predicated region
    $region6: #{tpu_custom_call.1} parent=1 // pred_check
      _
    $region7: #{tpu_custom_call.1} parent=1 // pred_check_branch
      %22 = sbr.rel (0) target = $region9
    $region8: #{tpu_custom_call.1} parent=1 // pred_region
      %s24 = ssub.s32 4096, 4096
      %25 = vsyncadd [#allocation6], %s24
      %s26 = sshll.u32 [#allocation5], 4
      %s27 = int_to_ptr.vmem [resolvable:$true] %s26
      %32 = dma.hbm_to_vmem [thread:$0]  %s1, 4096, %s27, [#allocation6], 1024, 1024, 64
    $region9: #{tpu_custom_call.1} parent=1 // pred_fallthru
      _
    // Predicated region
    $region10: #{tpu_custom_call.1} parent=1 // pred_check
      _
    $region11: #{tpu_custom_call.1} parent=1 // pred_check_branch
      %34 = sbr.rel (0) target = $region13
    $region12: #{tpu_custom_call.1} parent=1 // pred_region
      _
    $region13: #{tpu_custom_call.1} parent=1 // pred_fallthru
      _
    // Predicated region
    $region14: #{tpu_custom_call.1} parent=1 // pred_check
      _
    $region15: #{tpu_custom_call.1} parent=1 // pred_check_branch
      %36 = sbr.rel (0) target = $region17
    $region16: #{tpu_custom_call.1} parent=1 // pred_region
      %37 = dma.done [#allocation3], 256
    $region17: #{tpu_custom_call.1} parent=1 // pred_fallthru
      _
    // Predicated region
    $region18: #{tpu_custom_call.1} parent=1 // pred_check
      _
    $region19: #{tpu_custom_call.1} parent=1 // pred_check_branch
      %39 = sbr.rel (0) target = $region21
    $region20: #{tpu_custom_call.1} parent=1 // pred_region
      %40 = dma.done [#allocation6], 4096
    $region21: #{tpu_custom_call.1} parent=1 // pred_fallthru
      _
    %v41 = vld [vmem:[#allocation2] sm:$0xff]
    %v42 = vld [vmem:[#allocation2 + $0x8] sm:$0xff]
    %v43 = vld [vmem:[#allocation5] sm:$0xff]
    %v44 = vld [vmem:[#allocation5 + $0x8] sm:$0xff]
    %v45 = vld [vmem:[#allocation5 + $0x10] sm:$0xff]
    %v46 = vld [vmem:[#allocation5 + $0x18] sm:$0xff]
    %v47 = vld [vmem:[#allocation5 + $0x20] sm:$0xff]
    %v48 = vld [vmem:[#allocation5 + $0x28] sm:$0xff]
    %v49 = vld [vmem:[#allocation5 + $0x30] sm:$0xff]
    %v50 = vld [vmem:[#allocation5 + $0x38] sm:$0xff]
    %v51 = vld [vmem:[#allocation5 + $0x40] sm:$0xff]
    %v52 = vld [vmem:[#allocation5 + $0x48] sm:$0xff]
    %v53 = vld [vmem:[#allocation5 + $0x50] sm:$0xff]
    %v54 = vld [vmem:[#allocation5 + $0x58] sm:$0xff]
    %v55 = vld [vmem:[#allocation5 + $0x60] sm:$0xff]
    %v56 = vld [vmem:[#allocation5 + $0x68] sm:$0xff]
    %v57 = vld [vmem:[#allocation5 + $0x70] sm:$0xff]
    %v58 = vld [vmem:[#allocation5 + $0x78] sm:$0xff]
    %v59 = vld [vmem:[#allocation5 + $0x80] sm:$0xff]
    %v60 = vld [vmem:[#allocation5 + $0x88] sm:$0xff]
    %v61 = vld [vmem:[#allocation5 + $0x90] sm:$0xff]
    %v62 = vld [vmem:[#allocation5 + $0x98] sm:$0xff]
    %v63 = vld [vmem:[#allocation5 + $0xa0] sm:$0xff]
    %v64 = vld [vmem:[#allocation5 + $0xa8] sm:$0xff]
    %v65 = vld [vmem:[#allocation5 + $0xb0] sm:$0xff]
    %v66 = vld [vmem:[#allocation5 + $0xb8] sm:$0xff]
    %v67 = vld [vmem:[#allocation5 + $0xc0] sm:$0xff]
    %v68 = vld [vmem:[#allocation5 + $0xc8] sm:$0xff]
    %v69 = vld [vmem:[#allocation5 + $0xd0] sm:$0xff]
    %v70 = vld [vmem:[#allocation5 + $0xd8] sm:$0xff]
    %v71 = vld [vmem:[#allocation5 + $0xe0] sm:$0xff]
    %v72 = vld [vmem:[#allocation5 + $0xe8] sm:$0xff]
    %v73 = vld [vmem:[#allocation5 + $0xf0] sm:$0xff]
    %v74 = vld [vmem:[#allocation5 + $0xf8] sm:$0xff]
    %v75 = vld [vmem:[%s2] sm:$0x1]
    %v77 = vlaneseq
    %v78 = vshrl.u32 %v77, 7
    %v79 = vsub.s32 0, %v78
    %v80 = vrot.slane %v75, %v79
    %v84 = vcombine.high %v41, %v41
    %v86 = vunpack.c.l.s4 1983009808
    %v87 = vunpack.c.0.s8 %v86
    %v88 = vlaneseq
    %v89 = vshrl.u32 %v88, 7
    %v90 = vsub.s32 %v87, %v89
    %v91 = vrot.slane %v41, %v90
    %v93 = vunpack.c.l.s4 1983009808
    %v94 = vunpack.c.0.s8 %v93
    %v95 = vlaneseq
    %v96 = vshrl.u32 %v95, 7
    %v97 = vsub.s32 %v94, %v96
    %v98 = vrot.slane %v84, %v97
    %v99 = vcombine.high %v91, %v91
    %v100 = vcombine.high %v98, %v98
    %v101 = vcombine.high %v42, %v42
    %v103 = vunpack.c.l.s4 1983009808
    %v104 = vunpack.c.0.s8 %v103
    %v105 = vlaneseq
    %v106 = vshrl.u32 %v105, 7
    %v107 = vsub.s32 %v104, %v106
    %v108 = vrot.slane %v42, %v107
    %v110 = vunpack.c.l.s4 1983009808
    %v111 = vunpack.c.0.s8 %v110
    %v112 = vlaneseq
    %v113 = vshrl.u32 %v112, 7
    %v114 = vsub.s32 %v111, %v113
    %v115 = vrot.slane %v101, %v114
    %v116 = vcombine.high %v108, %v108
    %v117 = vcombine.high %v115, %v115
    %126 = vmatprep.subr.mxu0 %v44
    %127 = vmatpush1.xpose.msra.mxu0 %v43
    %128 = vmatprep.subr.mxu0 %v52
    %129 = vmatpush1.xpose.msra.mxu0 %v51
    %130 = vmatprep.subr.mxu0 %v60
    %131 = vmatpush1.xpose.msra.mxu0 %v59
    %132 = vmatprep.subr.mxu0 %v68
    %133 = vmatpush1.xpose.msra.mxu0 %v67
    %134 = vmatprep.subr.mxu0 0.0
    %135 = vmatpush1.xpose.msra.mxu0 0.0
    %136 = vmatprep.subr.mxu0 0.0
    %137 = vmatpush1.xpose.msra.mxu0 0.0
    %138 = vmatprep.subr.mxu0 0.0
    %139 = vmatpush1.xpose.msra.mxu0 0.0
    %140 = vmatprep.subr.mxu0 0.0
    %141 = vmatpush1.xpose.msra.mxu0 0.0
    %142 = vmatprep.subr.mxu0 0.0
    %143 = vmatpush1.xpose.msra.mxu0 0.0
    %144 = vmatprep.subr.mxu0 0.0
    %145 = vmatpush1.xpose.msra.mxu0 0.0
    %146 = vmatprep.subr.mxu0 0.0
    %147 = vmatpush1.xpose.msra.mxu0 0.0
    %148 = vmatprep.subr.mxu0 0.0
    %149 = vmatpush1.xpose.msra.mxu0 0.0
    %150 = vmatprep.subr.mxu0 0.0
    %151 = vmatpush1.xpose.msra.mxu0 0.0
    %152 = vmatprep.subr.mxu0 0.0
    %153 = vmatpush1.xpose.msra.mxu0 0.0
    %154 = vmatprep.subr.mxu0 0.0
    %155 = vmatpush1.xpose.msra.mxu0 0.0
    %156 = vmatprep.subr.mxu0 0.0
    %157 = vmatpush1.xpose.msra.mxu0 0.0
    %158 = vmatprep.subr.mxu0 0.0
    %159 = vmatpush1.xpose.msra.mxu0 0.0
    %160 = vmatprep.subr.mxu0 0.0
    %161 = vmatpush1.xpose.msra.mxu0 0.0
    %162 = vmatprep.subr.mxu0 0.0
    %163 = vmatpush1.xpose.msra.mxu0 0.0
    %164 = vmatprep.subr.mxu0 0.0
    %165 = vmatpush1.xpose.msra.mxu0 0.0
    %166 = vmatprep.subr.mxu0 0.0
    %167 = vmatpush1.xpose.msra.mxu0 0.0
    %168 = vmatprep.subr.mxu0 0.0
    %169 = vmatpush1.xpose.msra.mxu0 0.0
    %170 = vmatprep.subr.mxu0 0.0
    %171 = vmatpush1.xpose.msra.mxu0 0.0
    %172 = vmatprep.subr.mxu0 0.0
    %173 = vmatpush1.xpose.msra.mxu0 0.0
    %174 = vmatprep.subr.mxu0 0.0
    %175 = vmatpush1.xpose.msra.mxu0 0.0
    %176 = vmatprep.subr.mxu0 0.0
    %177 = vmatpush1.xpose.msra.mxu0 0.0
    %178 = vmatprep.subr.mxu0 0.0
    %179 = vmatpush1.xpose.msra.mxu0 0.0
    %180 = vmatprep.subr.mxu0 0.0
    %181 = vmatpush1.xpose.msra.mxu0 0.0
    %182 = vmatprep.subr.mxu0 0.0
    %183 = vmatpush1.xpose.msra.mxu0 0.0
    %184 = vmatprep.subr.mxu0 0.0
    %185 = vmatpush1.xpose.msra.mxu0 0.0
    %186 = vmatprep.subr.mxu0 0.0
    %187 = vmatpush1.xpose.msra.mxu0 0.0
    %188 = vmatprep.subr.mxu0 0.0
    %189 = vmatpush1.xpose.msra.mxu0 0.0
    %190 = vmatprep.mubr.f32.mxu0 %v99
    %191 = vmatmul.mubr.f32.gmra.mrb[0].mxu0 %v91
    %v192 = vpop.f32.mrb[0].mxu0
    %v193 = vadd.f32 %v80, %v192
    %v194 = vpop.f32.mrb[0].mxu0
    %195 = vdwg.mxu0
    %196 = vmatprep.subr.mxu0 %v46
    %197 = vmatpush1.xpose.msra.mxu0 %v45
    %198 = vmatprep.subr.mxu0 %v54
    %199 = vmatpush1.xpose.msra.mxu0 %v53
    %200 = vmatprep.subr.mxu0 %v62
    %201 = vmatpush1.xpose.msra.mxu0 %v61
    %202 = vmatprep.subr.mxu0 %v70
    %203 = vmatpush1.xpose.msra.mxu0 %v69
    %204 = vmatprep.subr.mxu0 0.0
    %205 = vmatpush1.xpose.msra.mxu0 0.0
    %206 = vmatprep.subr.mxu0 0.0
    %207 = vmatpush1.xpose.msra.mxu0 0.0
    %208 = vmatprep.subr.mxu0 0.0
    %209 = vmatpush1.xpose.msra.mxu0 0.0
    %210 = vmatprep.subr.mxu0 0.0
    %211 = vmatpush1.xpose.msra.mxu0 0.0
    %212 = vmatprep.subr.mxu0 0.0
    %213 = vmatpush1.xpose.msra.mxu0 0.0
    %214 = vmatprep.subr.mxu0 0.0
    %215 = vmatpush1.xpose.msra.mxu0 0.0
    %216 = vmatprep.subr.mxu0 0.0
    %217 = vmatpush1.xpose.msra.mxu0 0.0
    %218 = vmatprep.subr.mxu0 0.0
    %219 = vmatpush1.xpose.msra.mxu0 0.0
    %220 = vmatprep.subr.mxu0 0.0
    %221 = vmatpush1.xpose.msra.mxu0 0.0
    %222 = vmatprep.subr.mxu0 0.0
    %223 = vmatpush1.xpose.msra.mxu0 0.0
    %224 = vmatprep.subr.mxu0 0.0
    %225 = vmatpush1.xpose.msra.mxu0 0.0
    %226 = vmatprep.subr.mxu0 0.0
    %227 = vmatpush1.xpose.msra.mxu0 0.0
    %228 = vmatprep.subr.mxu0 0.0
    %229 = vmatpush1.xpose.msra.mxu0 0.0
    %230 = vmatprep.subr.mxu0 0.0
    %231 = vmatpush1.xpose.msra.mxu0 0.0
    %232 = vmatprep.subr.mxu0 0.0
    %233 = vmatpush1.xpose.msra.mxu0 0.0
    %234 = vmatprep.subr.mxu0 0.0
    %235 = vmatpush1.xpose.msra.mxu0 0.0
    %236 = vmatprep.subr.mxu0 0.0
    %237 = vmatpush1.xpose.msra.mxu0 0.0
    %238 = vmatprep.subr.mxu0 0.0
    %239 = vmatpush1.xpose.msra.mxu0 0.0
    %240 = vmatprep.subr.mxu0 0.0
    %241 = vmatpush1.xpose.msra.mxu0 0.0
    %242 = vmatprep.subr.mxu0 0.0
    %243 = vmatpush1.xpose.msra.mxu0 0.0
    %244 = vmatprep.subr.mxu0 0.0
    %245 = vmatpush1.xpose.msra.mxu0 0.0
    %246 = vmatprep.subr.mxu0 0.0
    %247 = vmatpush1.xpose.msra.mxu0 0.0
    %248 = vmatprep.subr.mxu0 0.0
    %249 = vmatpush1.xpose.msra.mxu0 0.0
    %250 = vmatprep.subr.mxu0 0.0
    %251 = vmatpush1.xpose.msra.mxu0 0.0
    %252 = vmatprep.subr.mxu0 0.0
    %253 = vmatpush1.xpose.msra.mxu0 0.0
    %254 = vmatprep.subr.mxu0 0.0
    %255 = vmatpush1.xpose.msra.mxu0 0.0
    %256 = vmatprep.subr.mxu0 0.0
    %257 = vmatpush1.xpose.msra.mxu0 0.0
    %258 = vmatprep.subr.mxu0 0.0
    %259 = vmatpush1.xpose.msra.mxu0 0.0
    %260 = vmatprep.mubr.f32.mxu0 %v100
    %261 = vmatmul.mubr.f32.gmra.mrb[0].mxu0 %v98
    %v262 = vpop.f32.mrb[0].mxu0
    %v263 = vadd.f32 %v193, %v262
    %v264 = vpop.f32.mrb[0].mxu0
    %265 = vdwg.mxu0
    %266 = vmatprep.subr.mxu0 %v48
    %267 = vmatpush1.xpose.msra.mxu0 %v47
    %268 = vmatprep.subr.mxu0 %v56
    %269 = vmatpush1.xpose.msra.mxu0 %v55
    %270 = vmatprep.subr.mxu0 %v64
    %271 = vmatpush1.xpose.msra.mxu0 %v63
    %272 = vmatprep.subr.mxu0 %v72
    %273 = vmatpush1.xpose.msra.mxu0 %v71
    %274 = vmatprep.subr.mxu0 0.0
    %275 = vmatpush1.xpose.msra.mxu0 0.0
    %276 = vmatprep.subr.mxu0 0.0
    %277 = vmatpush1.xpose.msra.mxu0 0.0
    %278 = vmatprep.subr.mxu0 0.0
    %279 = vmatpush1.xpose.msra.mxu0 0.0
    %280 = vmatprep.subr.mxu0 0.0
    %281 = vmatpush1.xpose.msra.mxu0 0.0
    %282 = vmatprep.subr.mxu0 0.0
    %283 = vmatpush1.xpose.msra.mxu0 0.0
    %284 = vmatprep.subr.mxu0 0.0
    %285 = vmatpush1.xpose.msra.mxu0 0.0
    %286 = vmatprep.subr.mxu0 0.0
    %287 = vmatpush1.xpose.msra.mxu0 0.0
    %288 = vmatprep.subr.mxu0 0.0
    %289 = vmatpush1.xpose.msra.mxu0 0.0
    %290 = vmatprep.subr.mxu0 0.0
    %291 = vmatpush1.xpose.msra.mxu0 0.0
    %292 = vmatprep.subr.mxu0 0.0
    %293 = vmatpush1.xpose.msra.mxu0 0.0
    %294 = vmatprep.subr.mxu0 0.0
    %295 = vmatpush1.xpose.msra.mxu0 0.0
    %296 = vmatprep.subr.mxu0 0.0
    %297 = vmatpush1.xpose.msra.mxu0 0.0
    %298 = vmatprep.subr.mxu0 0.0
    %299 = vmatpush1.xpose.msra.mxu0 0.0
    %300 = vmatprep.subr.mxu0 0.0
    %301 = vmatpush1.xpose.msra.mxu0 0.0
    %302 = vmatprep.subr.mxu0 0.0
    %303 = vmatpush1.xpose.msra.mxu0 0.0
    %304 = vmatprep.subr.mxu0 0.0
    %305 = vmatpush1.xpose.msra.mxu0 0.0
    %306 = vmatprep.subr.mxu0 0.0
    %307 = vmatpush1.xpose.msra.mxu0 0.0
    %308 = vmatprep.subr.mxu0 0.0
    %309 = vmatpush1.xpose.msra.mxu0 0.0
    %310 = vmatprep.subr.mxu0 0.0
    %311 = vmatpush1.xpose.msra.mxu0 0.0
    %312 = vmatprep.subr.mxu0 0.0
    %313 = vmatpush1.xpose.msra.mxu0 0.0
    %314 = vmatprep.subr.mxu0 0.0
    %315 = vmatpush1.xpose.msra.mxu0 0.0
    %316 = vmatprep.subr.mxu0 0.0
    %317 = vmatpush1.xpose.msra.mxu0 0.0
    %318 = vmatprep.subr.mxu0 0.0
    %319 = vmatpush1.xpose.msra.mxu0 0.0
    %320 = vmatprep.subr.mxu0 0.0
    %321 = vmatpush1.xpose.msra.mxu0 0.0
    %322 = vmatprep.subr.mxu0 0.0
    %323 = vmatpush1.xpose.msra.mxu0 0.0
    %324 = vmatprep.subr.mxu0 0.0
    %325 = vmatpush1.xpose.msra.mxu0 0.0
    %326 = vmatprep.subr.mxu0 0.0
    %327 = vmatpush1.xpose.msra.mxu0 0.0
    %328 = vmatprep.subr.mxu0 0.0
    %329 = vmatpush1.xpose.msra.mxu0 0.0
    %330 = vmatprep.mubr.f32.mxu0 %v116
    %331 = vmatmul.mubr.f32.gmra.mrb[0].mxu0 %v108
    %v332 = vpop.f32.mrb[0].mxu0
    %v333 = vadd.f32 %v263, %v332
    %v334 = vpop.f32.mrb[0].mxu0
    %335 = vdwg.mxu0
    %336 = vmatprep.subr.mxu0 %v50
    %337 = vmatpush1.xpose.msra.mxu0 %v49
    %338 = vmatprep.subr.mxu0 %v58
    %339 = vmatpush1.xpose.msra.mxu0 %v57
    %340 = vmatprep.subr.mxu0 %v66
    %341 = vmatpush1.xpose.msra.mxu0 %v65
    %342 = vmatprep.subr.mxu0 %v74
    %343 = vmatpush1.xpose.msra.mxu0 %v73
    %344 = vmatprep.subr.mxu0 0.0
    %345 = vmatpush1.xpose.msra.mxu0 0.0
    %346 = vmatprep.subr.mxu0 0.0
    %347 = vmatpush1.xpose.msra.mxu0 0.0
    %348 = vmatprep.subr.mxu0 0.0
    %349 = vmatpush1.xpose.msra.mxu0 0.0
    %350 = vmatprep.subr.mxu0 0.0
    %351 = vmatpush1.xpose.msra.mxu0 0.0
    %352 = vmatprep.subr.mxu0 0.0
    %353 = vmatpush1.xpose.msra.mxu0 0.0
    %354 = vmatprep.subr.mxu0 0.0
    %355 = vmatpush1.xpose.msra.mxu0 0.0
    %356 = vmatprep.subr.mxu0 0.0
    %357 = vmatpush1.xpose.msra.mxu0 0.0
    %358 = vmatprep.subr.mxu0 0.0
    %359 = vmatpush1.xpose.msra.mxu0 0.0
    %360 = vmatprep.subr.mxu0 0.0
    %361 = vmatpush1.xpose.msra.mxu0 0.0
    %362 = vmatprep.subr.mxu0 0.0
    %363 = vmatpush1.xpose.msra.mxu0 0.0
    %364 = vmatprep.subr.mxu0 0.0
    %365 = vmatpush1.xpose.msra.mxu0 0.0
    %366 = vmatprep.subr.mxu0 0.0
    %367 = vmatpush1.xpose.msra.mxu0 0.0
    %368 = vmatprep.subr.mxu0 0.0
    %369 = vmatpush1.xpose.msra.mxu0 0.0
    %370 = vmatprep.subr.mxu0 0.0
    %371 = vmatpush1.xpose.msra.mxu0 0.0
    %372 = vmatprep.subr.mxu0 0.0
    %373 = vmatpush1.xpose.msra.mxu0 0.0
    %374 = vmatprep.subr.mxu0 0.0
    %375 = vmatpush1.xpose.msra.mxu0 0.0
    %376 = vmatprep.subr.mxu0 0.0
    %377 = vmatpush1.xpose.msra.mxu0 0.0
    %378 = vmatprep.subr.mxu0 0.0
    %379 = vmatpush1.xpose.msra.mxu0 0.0
    %380 = vmatprep.subr.mxu0 0.0
    %381 = vmatpush1.xpose.msra.mxu0 0.0
    %382 = vmatprep.subr.mxu0 0.0
    %383 = vmatpush1.xpose.msra.mxu0 0.0
    %384 = vmatprep.subr.mxu0 0.0
    %385 = vmatpush1.xpose.msra.mxu0 0.0
    %386 = vmatprep.subr.mxu0 0.0
    %387 = vmatpush1.xpose.msra.mxu0 0.0
    %388 = vmatprep.subr.mxu0 0.0
    %389 = vmatpush1.xpose.msra.mxu0 0.0
    %390 = vmatprep.subr.mxu0 0.0
    %391 = vmatpush1.xpose.msra.mxu0 0.0
    %392 = vmatprep.subr.mxu0 0.0
    %393 = vmatpush1.xpose.msra.mxu0 0.0
    %394 = vmatprep.subr.mxu0 0.0
    %395 = vmatpush1.xpose.msra.mxu0 0.0
    %396 = vmatprep.subr.mxu0 0.0
    %397 = vmatpush1.xpose.msra.mxu0 0.0
    %398 = vmatprep.subr.mxu0 0.0
    %399 = vmatpush1.xpose.msra.mxu0 0.0
    %400 = vmatprep.mubr.f32.mxu0 %v117
    %401 = vmatmul.mubr.f32.gmra.mrb[0].mxu0 %v115
    %v402 = vpop.f32.mrb[0].mxu0
    %v403 = vadd.f32 %v333, %v402
    %v404 = vpop.f32.mrb[0].mxu0
    %405 = vdwg.mxu0
    %vm406 = vcmp.ge.f32.partialorder %v403, 0.0
    %v407 = vmul.f32 %v403, 0.2
    %v408 = vsel %vm406, %v403, %v407
    %vm409 = vcmask 254976
    %410 = vst.msk [vmem:[#allocation7] sm:$0x3] %vm409, %v408
    // Predicated region
    $region22: #{tpu_custom_call.1} parent=1 // pred_check
      _
    $region23: #{tpu_custom_call.1} parent=1 // pred_check_branch
      %412 = sbr.rel (0) target = $region25
    $region24: #{tpu_custom_call.1} parent=1 // pred_region
      %s414 = ssub.s32 32, 32
      %415 = vsyncadd [#allocation4], %s414
      %s417 = sshll.u32 [#allocation7], 4
      %s418 = int_to_ptr.vmem [resolvable:$true] %s417
      %420 = dma.vmem_to_hbm [thread:$0]  %s418, 32, %s3, [#allocation4]
    $region25: #{tpu_custom_call.1} parent=1 // pred_fallthru
      _
    // Predicated region
    $region26: #{tpu_custom_call.1} parent=1 // pred_check
      _
    $region27: #{tpu_custom_call.1} parent=1 // pred_check_branch
      %422 = sbr.rel (0) target = $region29
    $region28: #{tpu_custom_call.1} parent=1 // pred_region
      %423 = dma.done [#allocation4], 32
    $region29: #{tpu_custom_call.1} parent=1 // pred_fallthru
      _
    %424 = vsyncpa [#allocation3], 1
    %425 = vsyncpa [#allocation6], 1
    %426 = vsyncpa [#allocation4], 1

</llo_original>
